<compile_context>
chip_gen: v7x
topology: tpu7x:2x2x1
jax: 0.10.0
libtpu: 0.0.40
codegen_flags: <defaults>
</compile_context>

<pallas_src>
import jax
import jax.numpy as jnp
from jax.experimental import pallas as pl
from jax.experimental.pallas import tpu as pltpu


def _round_up(x, m):
    return (x + m - 1) // m * m


def _make_conv_kernel(KH, sh, Wr, Mr):
    """Fused overlap-patch-embed kernel: KH shifted tap-GEMMs + bias epilogue."""

    def kernel(p_ref, w_ref, b_ref, o_ref, acc_ref):
        # p_ref  : [1, sh, Hq*Wr, KW*C]  bf16  one image; H space-to-depth
        #          (row n = hq*Wr + wo), W-taps & channels gathered in lanes.
        # w_ref  : [KH, KW*C, Epad]      bf16  per-kh weight slabs (resident).
        # b_ref  : [1, Epad]             f32   bias (padded to Epad).
        # o_ref  : [1, Mr, Epad]         out dtype, lane-dense (Epad % 128 == 0).
        # acc_ref: [Mr, Epad]            f32 scratch accumulator.
        for kh in range(KH):
            rh, qh = kh % sh, kh // sh
            # Tap kh needs rows (ho + qh)*Wr + wo -> a contiguous, 16-aligned
            # row block of the space-to-depth plane rh.
            lhs = p_ref[0, rh, pl.ds(qh * Wr, Mr), :]            # [Mr, KW*C]
            contrib = jnp.dot(lhs, w_ref[kh],
                              preferred_element_type=jnp.float32)
            if kh == 0:
                acc_ref[...] = contrib
            else:
                acc_ref[...] += contrib
        o_ref[0] = (acc_ref[...] + b_ref[...]).astype(o_ref.dtype)

    return kernel


def overlap_patch_embed(x_nchw, weight, bias, *, stride, padding,
                        compute_dtype=jnp.bfloat16, channels_last_out=False):
    """Conv2d(in_chans, E, kernel, stride, padding) on NCHW input.

    Returns NCHW by default (module-faithful); pass channels_last_out=True to
    skip the final transpose when the consumer takes NHWC tokens (as ActiveMLP
    does right after patch_embed).
    """
    B, C, H, W = x_nchw.shape
    E, Cw, KH, KW = weight.shape
    assert C == Cw
    sh, sw = stride
    ph, pw = padding
    Hout = (H + 2 * ph - KH) // sh + 1
    Wout = (W + 2 * pw - KW) // sw + 1

    qh_max = (KH - 1) // sh            # max whole-row shift of an H tap
    Hq = Hout + qh_max                 # space-to-depth rows (covers all taps)
    Hp = Hq * sh
    Wp = (Wout - 1) * sw + KW

    # Pad / crop spatially to exactly (Hp, Wp).  Extra zero rows/cols are never
    # touched by any (kh, kw) tap of a valid output position.
    x_p = jnp.pad(x_nchw, ((0, 0), (0, 0),
                           (ph, max(0, Hp - H - ph)),
                           (pw, max(0, Wp - W - pw))))
    x_p = x_p[:, :, :Hp, :Wp]

    # Single layout pass (replaces NCHW->NHWC transpose AND the 3x im2col):
    #   gather the KW width-taps + channels into the lane dim, pad the output
    #   column axis to Wr (multiple of 16 -> aligned bf16 row blocks in-kernel),
    #   and space-to-depth the H axis (h = hq*sh + rh).
    cols = [x_p[:, :, :, kw: kw + (Wout - 1) * sw + 1: sw] for kw in range(KW)]
    xw = jnp.stack(cols, axis=-1)                        # [B, C, Hp, Wout, KW]
    Wr = _round_up(Wout, 16)
    xw = jnp.pad(xw, ((0, 0), (0, 0), (0, 0), (0, Wr - Wout), (0, 0)))
    xw = xw.reshape(B, C, Hq, sh, Wr, KW)
    p = jnp.transpose(xw, (0, 3, 2, 4, 5, 1))            # [B, sh, Hq, Wr, KW, C]
    Kdim = KW * C
    p = p.reshape(B, sh, Hq * Wr, Kdim).astype(compute_dtype)

    # Weights [E, C, KH, KW] -> [KH, KW*C, Epad], matching the (kw, c) lane
    # ordering above.  E padded to a multiple of 128 for lane-dense stores
    # (zero columns are free FLOPs on the MXU); bias kept exact in f32.
    Epad = _round_up(E, 128)
    w_t = jnp.transpose(weight, (2, 3, 1, 0)).reshape(KH, Kdim, E)
    w_t = jnp.pad(w_t, ((0, 0), (0, 0), (0, Epad - E))).astype(compute_dtype)
    b_row = jnp.pad(bias.astype(jnp.float32), (0, Epad - E)).reshape(1, Epad)

    Mr = Hout * Wr                                       # GEMM rows per image
    kernel = _make_conv_kernel(KH, sh, Wr, Mr)

    out = pl.pallas_call(
        kernel,
        out_shape=jax.ShapeDtypeStruct((B, Mr, Epad), x_nchw.dtype),
        grid_spec=pltpu.PrefetchScalarGridSpec(
            num_scalar_prefetch=0,
            grid=(B,),
            in_specs=[
                # one whole image worth of taps per step (big tile by design)
                pl.BlockSpec((1, sh, Hq * Wr, Kdim), lambda b: (b, 0, 0, 0)),
                # weights + bias: constant index -> fetched once, kept resident
                pl.BlockSpec((KH, Kdim, Epad), lambda b: (0, 0, 0)),
                pl.BlockSpec((1, Epad), lambda b: (0, 0)),
            ],
            out_specs=pl.BlockSpec((1, Mr, Epad), lambda b: (b, 0, 0)),
            scratch_shapes=[pltpu.VMEM((Mr, Epad), jnp.float32)],
        ),
        compiler_params=pltpu.CompilerParams(
            dimension_semantics=("parallel",)),   # batch shards v7x's 2 TCs
    )(p, w_t, b_row)

    out = out.reshape(B, Hout, Wr, Epad)[:, :, :Wout, :E]   # NHWC
    if channels_last_out:
        return out
    return jnp.transpose(out, (0, 3, 1, 2))                 # NCHW (like Conv2d)


if __name__ == "__main__":
    key = jax.random.PRNGKey(0)
    k1, k2, k3 = jax.random.split(key, 3)

    # Small shapes consistent with the module (patch_size=7, stride=4, padding=2)
    B, C, H, W = 2, 4, 16, 16
    E, K, S, P = 32, 7, 4, 2

    x = jax.random.normal(k1, (B, C, H, W), jnp.float32)

    # Deterministic Conv2d-style init (uniform in +-1/sqrt(fan_in))
    fan_in = C * K * K
    bound = 1.0 / (fan_in ** 0.5)
    weight = jax.random.uniform(k2, (E, C, K, K), jnp.float32, -bound, bound)
    bias = jax.random.uniform(k3, (E,), jnp.float32, -bound, bound)

    out = overlap_patch_embed(x, weight, bias, stride=(S, S), padding=(P, P))
    out = jax.block_until_ready(out)

    # Reference conv (XLA) with the same bf16 rounding of x / weight that the
    # kernel streams (accumulation is f32 in both), so the check stays tight.
    x_q = x.astype(jnp.bfloat16).astype(jnp.float32)
    w_q = weight.astype(jnp.bfloat16).astype(jnp.float32)
    ref = jax.lax.conv_general_dilated(
        x_q, w_q, window_strides=(S, S), padding=((P, P), (P, P)),
        dimension_numbers=("NCHW", "OIHW", "NCHW"),
    ) + bias[None, :, None, None]

    Hout = (H + 2 * P - K) // S + 1
    Wout = (W + 2 * P - K) // S + 1
    assert out.shape == (B, E, Hout, Wout), out.shape
    err = float(jnp.max(jnp.abs(out - ref)))
    assert jnp.allclose(out, ref, atol=2e-3, rtol=2e-3), err

    print("KERNEL_OK")
</pallas_src>

<mosaic_0001>
module attributes {stable_mosaic.version = 11 : i64} {
  func.func @kernel(%arg0: i32, %arg1: memref<1x4x80x28xbf16, #tpu.memory_space<vmem>>, %arg2: memref<7x28x128xbf16, #tpu.memory_space<vmem>>, %arg3: memref<1x128xf32, #tpu.memory_space<vmem>>, %arg4: memref<1x64x128xf32, #tpu.memory_space<vmem>>, %arg5: memref<64x128xf32, #tpu.memory_space<vmem>>) attributes {dimension_semantics = [#tpu.dimension_semantics<parallel>], iteration_bounds = array<i64: 2>, scalar_prefetch = 0 : i64, scratch_operands = 1 : i64, tpu.core_type = #tpu.core_type<tc>, window_params = [{transform_indices = @transform_0, window_bounds = array<i64: 1, 4, 80, 28>}, {pipeline_mode = #tpu.pipeline_mode<synchronous>, transform_indices = @transform_1, window_bounds = array<i64: 7, 28, 128>}, {pipeline_mode = #tpu.pipeline_mode<synchronous>, transform_indices = @transform_2, window_bounds = array<i64: 1, 128>}, {transform_indices = @transform_3, window_bounds = array<i64: 1, 64, 128>}]} {
    %c0 = arith.constant 0 : index
    %c0_0 = arith.constant 0 : index
    %c0_1 = arith.constant 0 : index
    %c0_2 = arith.constant 0 : index
    %0 = vector.load %arg1[%c0, %c0_0, %c0_1, %c0_2] : memref<1x4x80x28xbf16, #tpu.memory_space<vmem>>, vector<1x1x64x28xbf16>
    %1 = vector.shape_cast %0 : vector<1x1x64x28xbf16> to vector<64x28xbf16>
    %c0_3 = arith.constant 0 : index
    %c0_4 = arith.constant 0 : index
    %c0_5 = arith.constant 0 : index
    %2 = vector.load %arg2[%c0_3, %c0_4, %c0_5] : memref<7x28x128xbf16, #tpu.memory_space<vmem>>, vector<1x28x128xbf16>
    %3 = vector.shape_cast %2 : vector<1x28x128xbf16> to vector<28x128xbf16>
    %cst = arith.constant dense<0.000000e+00> : vector<64x128xf32>
    %4 = tpu.matmul %1, %3, %cst {dimension_numbers = #tpu.dot_dimension_numbers<[1], [0], [0], [1], [0, 0, 1, 1], [], []>} : vector<64x28xbf16>, vector<28x128xbf16>, vector<64x128xf32> -> vector<64x128xf32>
    %c0_6 = arith.constant 0 : index
    %c0_7 = arith.constant 0 : index
    %5 = vector.load %arg5[%c0_6, %c0_7] : memref<64x128xf32, #tpu.memory_space<vmem>>, vector<64x128xf32>
    tpu.vector_store %arg5[%c0_6, %c0_7], %4 {strides = array<i32>} : memref<64x128xf32, #tpu.memory_space<vmem>>, vector<64x128xf32>,
    %c0_8 = arith.constant 0 : index
    %c1 = arith.constant 1 : index
    %c0_9 = arith.constant 0 : index
    %c0_10 = arith.constant 0 : index
    %6 = vector.load %arg1[%c0_8, %c1, %c0_9, %c0_10] : memref<1x4x80x28xbf16, #tpu.memory_space<vmem>>, vector<1x1x64x28xbf16>
    %7 = vector.shape_cast %6 : vector<1x1x64x28xbf16> to vector<64x28xbf16>
    %c1_11 = arith.constant 1 : index
    %c0_12 = arith.constant 0 : index
    %c0_13 = arith.constant 0 : index
    %8 = vector.load %arg2[%c1_11, %c0_12, %c0_13] : memref<7x28x128xbf16, #tpu.memory_space<vmem>>, vector<1x28x128xbf16>
    %9 = vector.shape_cast %8 : vector<1x28x128xbf16> to vector<28x128xbf16>
    %cst_14 = arith.constant dense<0.000000e+00> : vector<64x128xf32>
    %10 = tpu.matmul %7, %9, %cst_14 {dimension_numbers = #tpu.dot_dimension_numbers<[1], [0], [0], [1], [0, 0, 1, 1], [], []>} : vector<64x28xbf16>, vector<28x128xbf16>, vector<64x128xf32> -> vector<64x128xf32>
    %c0_15 = arith.constant 0 : index
    %c0_16 = arith.constant 0 : index
    %11 = vector.load %arg5[%c0_15, %c0_16] : memref<64x128xf32, #tpu.memory_space<vmem>>, vector<64x128xf32>
    %12 = arith.addf %11, %10 : vector<64x128xf32>
    %c0_17 = arith.constant 0 : index
    %c0_18 = arith.constant 0 : index
    %13 = vector.load %arg5[%c0_17, %c0_18] : memref<64x128xf32, #tpu.memory_space<vmem>>, vector<64x128xf32>
    tpu.vector_store %arg5[%c0_17, %c0_18], %12 {strides = array<i32>} : memref<64x128xf32, #tpu.memory_space<vmem>>, vector<64x128xf32>,
    %c0_19 = arith.constant 0 : index
    %c2 = arith.constant 2 : index
    %c0_20 = arith.constant 0 : index
    %c0_21 = arith.constant 0 : index
    %14 = vector.load %arg1[%c0_19, %c2, %c0_20, %c0_21] : memref<1x4x80x28xbf16, #tpu.memory_space<vmem>>, vector<1x1x64x28xbf16>
    %15 = vector.shape_cast %14 : vector<1x1x64x28xbf16> to vector<64x28xbf16>
    %c2_22 = arith.constant 2 : index
    %c0_23 = arith.constant 0 : index
    %c0_24 = arith.constant 0 : index
    %16 = vector.load %arg2[%c2_22, %c0_23, %c0_24] : memref<7x28x128xbf16, #tpu.memory_space<vmem>>, vector<1x28x128xbf16>
    %17 = vector.shape_cast %16 : vector<1x28x128xbf16> to vector<28x128xbf16>
    %cst_25 = arith.constant dense<0.000000e+00> : vector<64x128xf32>
    %18 = tpu.matmul %15, %17, %cst_25 {dimension_numbers = #tpu.dot_dimension_numbers<[1], [0], [0], [1], [0, 0, 1, 1], [], []>} : vector<64x28xbf16>, vector<28x128xbf16>, vector<64x128xf32> -> vector<64x128xf32>
    %c0_26 = arith.constant 0 : index
    %c0_27 = arith.constant 0 : index
    %19 = vector.load %arg5[%c0_26, %c0_27] : memref<64x128xf32, #tpu.memory_space<vmem>>, vector<64x128xf32>
    %20 = arith.addf %19, %18 : vector<64x128xf32>
    %c0_28 = arith.constant 0 : index
    %c0_29 = arith.constant 0 : index
    %21 = vector.load %arg5[%c0_28, %c0_29] : memref<64x128xf32, #tpu.memory_space<vmem>>, vector<64x128xf32>
    tpu.vector_store %arg5[%c0_28, %c0_29], %20 {strides = array<i32>} : memref<64x128xf32, #tpu.memory_space<vmem>>, vector<64x128xf32>,
    %c0_30 = arith.constant 0 : index
    %c3 = arith.constant 3 : index
    %c0_31 = arith.constant 0 : index
    %c0_32 = arith.constant 0 : index
    %22 = vector.load %arg1[%c0_30, %c3, %c0_31, %c0_32] : memref<1x4x80x28xbf16, #tpu.memory_space<vmem>>, vector<1x1x64x28xbf16>
    %23 = vector.shape_cast %22 : vector<1x1x64x28xbf16> to vector<64x28xbf16>
    %c3_33 = arith.constant 3 : index
    %c0_34 = arith.constant 0 : index
    %c0_35 = arith.constant 0 : index
    %24 = vector.load %arg2[%c3_33, %c0_34, %c0_35] : memref<7x28x128xbf16, #tpu.memory_space<vmem>>, vector<1x28x128xbf16>
    %25 = vector.shape_cast %24 : vector<1x28x128xbf16> to vector<28x128xbf16>
    %cst_36 = arith.constant dense<0.000000e+00> : vector<64x128xf32>
    %26 = tpu.matmul %23, %25, %cst_36 {dimension_numbers = #tpu.dot_dimension_numbers<[1], [0], [0], [1], [0, 0, 1, 1], [], []>} : vector<64x28xbf16>, vector<28x128xbf16>, vector<64x128xf32> -> vector<64x128xf32>
    %c0_37 = arith.constant 0 : index
    %c0_38 = arith.constant 0 : index
    %27 = vector.load %arg5[%c0_37, %c0_38] : memref<64x128xf32, #tpu.memory_space<vmem>>, vector<64x128xf32>
    %28 = arith.addf %27, %26 : vector<64x128xf32>
    %c0_39 = arith.constant 0 : index
    %c0_40 = arith.constant 0 : index
    %29 = vector.load %arg5[%c0_39, %c0_40] : memref<64x128xf32, #tpu.memory_space<vmem>>, vector<64x128xf32>
    tpu.vector_store %arg5[%c0_39, %c0_40], %28 {strides = array<i32>} : memref<64x128xf32, #tpu.memory_space<vmem>>, vector<64x128xf32>,
    %c0_41 = arith.constant 0 : index
    %c0_42 = arith.constant 0 : index
    %c16 = arith.constant 16 : index
    %c0_43 = arith.constant 0 : index
    %30 = vector.load %arg1[%c0_41, %c0_42, %c16, %c0_43] : memref<1x4x80x28xbf16, #tpu.memory_space<vmem>>, vector<1x1x64x28xbf16>
    %31 = vector.shape_cast %30 : vector<1x1x64x28xbf16> to vector<64x28xbf16>
    %c4 = arith.constant 4 : index
    %c0_44 = arith.constant 0 : index
    %c0_45 = arith.constant 0 : index
    %32 = vector.load %arg2[%c4, %c0_44, %c0_45] : memref<7x28x128xbf16, #tpu.memory_space<vmem>>, vector<1x28x128xbf16>
    %33 = vector.shape_cast %32 : vector<1x28x128xbf16> to vector<28x128xbf16>
    %cst_46 = arith.constant dense<0.000000e+00> : vector<64x128xf32>
    %34 = tpu.matmul %31, %33, %cst_46 {dimension_numbers = #tpu.dot_dimension_numbers<[1], [0], [0], [1], [0, 0, 1, 1], [], []>} : vector<64x28xbf16>, vector<28x128xbf16>, vector<64x128xf32> -> vector<64x128xf32>
    %c0_47 = arith.constant 0 : index
    %c0_48 = arith.constant 0 : index
    %35 = vector.load %arg5[%c0_47, %c0_48] : memref<64x128xf32, #tpu.memory_space<vmem>>, vector<64x128xf32>
    %36 = arith.addf %35, %34 : vector<64x128xf32>
    %c0_49 = arith.constant 0 : index
    %c0_50 = arith.constant 0 : index
    %37 = vector.load %arg5[%c0_49, %c0_50] : memref<64x128xf32, #tpu.memory_space<vmem>>, vector<64x128xf32>
    tpu.vector_store %arg5[%c0_49, %c0_50], %36 {strides = array<i32>} : memref<64x128xf32, #tpu.memory_space<vmem>>, vector<64x128xf32>,
    %c0_51 = arith.constant 0 : index
    %c1_52 = arith.constant 1 : index
    %c16_53 = arith.constant 16 : index
    %c0_54 = arith.constant 0 : index
    %38 = vector.load %arg1[%c0_51, %c1_52, %c16_53, %c0_54] : memref<1x4x80x28xbf16, #tpu.memory_space<vmem>>, vector<1x1x64x28xbf16>
    %39 = vector.shape_cast %38 : vector<1x1x64x28xbf16> to vector<64x28xbf16>
    %c5 = arith.constant 5 : index
    %c0_55 = arith.constant 0 : index
    %c0_56 = arith.constant 0 : index
    %40 = vector.load %arg2[%c5, %c0_55, %c0_56] : memref<7x28x128xbf16, #tpu.memory_space<vmem>>, vector<1x28x128xbf16>
    %41 = vector.shape_cast %40 : vector<1x28x128xbf16> to vector<28x128xbf16>
    %cst_57 = arith.constant dense<0.000000e+00> : vector<64x128xf32>
    %42 = tpu.matmul %39, %41, %cst_57 {dimension_numbers = #tpu.dot_dimension_numbers<[1], [0], [0], [1], [0, 0, 1, 1], [], []>} : vector<64x28xbf16>, vector<28x128xbf16>, vector<64x128xf32> -> vector<64x128xf32>
    %c0_58 = arith.constant 0 : index
    %c0_59 = arith.constant 0 : index
    %43 = vector.load %arg5[%c0_58, %c0_59] : memref<64x128xf32, #tpu.memory_space<vmem>>, vector<64x128xf32>
    %44 = arith.addf %43, %42 : vector<64x128xf32>
    %c0_60 = arith.constant 0 : index
    %c0_61 = arith.constant 0 : index
    %45 = vector.load %arg5[%c0_60, %c0_61] : memref<64x128xf32, #tpu.memory_space<vmem>>, vector<64x128xf32>
    tpu.vector_store %arg5[%c0_60, %c0_61], %44 {strides = array<i32>} : memref<64x128xf32, #tpu.memory_space<vmem>>, vector<64x128xf32>,
    %c0_62 = arith.constant 0 : index
    %c2_63 = arith.constant 2 : index
    %c16_64 = arith.constant 16 : index
    %c0_65 = arith.constant 0 : index
    %46 = vector.load %arg1[%c0_62, %c2_63, %c16_64, %c0_65] : memref<1x4x80x28xbf16, #tpu.memory_space<vmem>>, vector<1x1x64x28xbf16>
    %47 = vector.shape_cast %46 : vector<1x1x64x28xbf16> to vector<64x28xbf16>
    %c6 = arith.constant 6 : index
    %c0_66 = arith.constant 0 : index
    %c0_67 = arith.constant 0 : index
    %48 = vector.load %arg2[%c6, %c0_66, %c0_67] : memref<7x28x128xbf16, #tpu.memory_space<vmem>>, vector<1x28x128xbf16>
    %49 = vector.shape_cast %48 : vector<1x28x128xbf16> to vector<28x128xbf16>
    %cst_68 = arith.constant dense<0.000000e+00> : vector<64x128xf32>
    %50 = tpu.matmul %47, %49, %cst_68 {dimension_numbers = #tpu.dot_dimension_numbers<[1], [0], [0], [1], [0, 0, 1, 1], [], []>} : vector<64x28xbf16>, vector<28x128xbf16>, vector<64x128xf32> -> vector<64x128xf32>
    %c0_69 = arith.constant 0 : index
    %c0_70 = arith.constant 0 : index
    %51 = vector.load %arg5[%c0_69, %c0_70] : memref<64x128xf32, #tpu.memory_space<vmem>>, vector<64x128xf32>
    %52 = arith.addf %51, %50 : vector<64x128xf32>
    %c0_71 = arith.constant 0 : index
    %c0_72 = arith.constant 0 : index
    %53 = vector.load %arg5[%c0_71, %c0_72] : memref<64x128xf32, #tpu.memory_space<vmem>>, vector<64x128xf32>
    tpu.vector_store %arg5[%c0_71, %c0_72], %52 {strides = array<i32>} : memref<64x128xf32, #tpu.memory_space<vmem>>, vector<64x128xf32>,
    %c0_73 = arith.constant 0 : index
    %c0_74 = arith.constant 0 : index
    %54 = vector.load %arg5[%c0_73, %c0_74] : memref<64x128xf32, #tpu.memory_space<vmem>>, vector<64x128xf32>
    %c0_75 = arith.constant 0 : index
    %c0_76 = arith.constant 0 : index
    %55 = vector.load %arg3[%c0_75, %c0_76] : memref<1x128xf32, #tpu.memory_space<vmem>>, vector<1x128xf32>
    %56 = vector.broadcast %55 : vector<1x128xf32> to vector<64x128xf32>
    %57 = arith.addf %54, %56 : vector<64x128xf32>
    %c0_77 = arith.constant 0 : index
    %c0_78 = arith.constant 0 : index
    %c0_79 = arith.constant 0 : index
    %58 = vector.load %arg4[%c0_77, %c0_78, %c0_79] : memref<1x64x128xf32, #tpu.memory_space<vmem>>, vector<1x64x128xf32>
    %59 = vector.shape_cast %58 : vector<1x64x128xf32> to vector<64x128xf32>
    %60 = vector.shape_cast %57 : vector<64x128xf32> to vector<1x64x128xf32>
    tpu.vector_store %arg4[%c0_77, %c0_78, %c0_79], %60 {strides = array<i32>} : memref<1x64x128xf32, #tpu.memory_space<vmem>>, vector<1x64x128xf32>,
    return
  }
  func.func @transform_0(%arg0: i32) -> (i32, i32, i32, i32) {
    %c0_i32 = arith.constant 0 : i32
    %c0_i32_0 = arith.constant 0 : i32
    %c0_i32_1 = arith.constant 0 : i32
    %c0_i32_2 = arith.constant 0 : i32
    return %arg0, %c0_i32, %c0_i32_0, %c0_i32_1 : i32, i32, i32, i32
  }
  func.func @transform_1(%arg0: i32) -> (i32, i32, i32) {
    %c0_i32 = arith.constant 0 : i32
    %c0_i32_0 = arith.constant 0 : i32
    %c0_i32_1 = arith.constant 0 : i32
    %c0_i32_2 = arith.constant 0 : i32
    return %c0_i32, %c0_i32_0, %c0_i32_1 : i32, i32, i32
  }
  func.func @transform_2(%arg0: i32) -> (i32, i32) {
    %c0_i32 = arith.constant 0 : i32
    %c0_i32_0 = arith.constant 0 : i32
    %c0_i32_1 = arith.constant 0 : i32
    return %c0_i32, %c0_i32_0 : i32, i32
  }
  func.func @transform_3(%arg0: i32) -> (i32, i32, i32) {
    %c0_i32 = arith.constant 0 : i32
    %c0_i32_0 = arith.constant 0 : i32
    %c0_i32_1 = arith.constant 0 : i32
    return %arg0, %c0_i32, %c0_i32_0 : i32, i32, i32
  }
}

</mosaic_0001>

<llo_original>
// kernel: tpu_custom_call.1
$region0: #{tpu_custom_call.1}
  #allocation0 [shape = 'u32[]', space=smem, size = 0x4, offset = 0x4, fixed_abs, tag = 'smem constant byte address 0x4 - core index']
  #allocation1 [shape = 'u32[144,128]{1,0:T(1,128)}', space=vmem, size = 0x12000, scoped, tag = 'internal scratch']
  #allocation2 [shape = 'f32[64,128]{1,0:T(8,128)}', space=vmem, size = 0x8000, scoped, tag = 'scratch operand']
  %s0 = inlined_call_operand.vmem [shape: bf16[2,4,80,28], index: 0, kind: input, shape index: {}]
  %s1 = inlined_call_operand.vmem [shape: bf16[7,28,128], index: 1, kind: input, shape index: {}]
  %s2 = inlined_call_operand.vmem [shape: f32[1,128], index: 2, kind: input, shape index: {}]
  %s3 = inlined_call_operand.hbm [shape: f32[2,64,128], index: 3, kind: output, shape index: {}]
  %s4 = sld [smem:[#allocation0]]
  $region45: #{tpu_custom_call.1} parent=0
    _
  %s6 = ssub.s32 1, %s4
  %s7 = scalar_select 0, %s6, %s4
  $region1: #{tpu_custom_call.1} parent=0
    #allocation3 [shape = 'u8[65536]{0}', space=vmem, size = 0x10000, scoped, tag = 'output window, operand 0']
    #allocation4 [shape = 's32[2]{0}', space=sflag, size = 0x8, scoped, tag = 'scoped memory for tpu_custom_call.1']
    %8 = vsyncpa [#allocation4], 0
    %s9 = scalar_lea.sflag [#allocation4], 1
    %10 = vsyncpa %s9, 0
    loop: start=0, step=1, limit=4
    $region2: #{tpu_custom_call.1} parent=1 // loop_pre_header
      _
    $region3: #{tpu_custom_call.1} parent=1 // loop_header
      %s12 = sphi 0, %s16
      %p13 = scmp.ge.s32.totalorder %s12, 4
      %s22 = sphi 0, %s24
      %s25 = sphi 0, %s22
      %s26 = sphi 0, %s25
      %s42 = sphi 0, %s26
      %s46 = sphi 0, %s46
      %s48 = sphi 0, %s46
      %s49 = sphi 0, %s48
      %s63 = sphi 0, %s49
      %s67 = sphi 0, %s67
      %s69 = sphi 0, %s67
      %s70 = sphi 0, %s69
      %s84 = sphi 0, %s70
      %s90 = sphi 0, %s92
      %s93 = sphi 0, %s90
      %s94 = sphi 0, %s93
      %s110 = sphi 0, %s94
    $region4: #{tpu_custom_call.1} parent=1 // loop_header_branch
      %15 = sbr.rel (%p13) target = $region8
    $region5: #{tpu_custom_call.1} parent=1 // loop_body
      %s17 = ssub.s32 %s12, 1
      %s18 = ssub.s32 %s12, 2
      %s19 = sadd.s32 %s12, 1
      %s20 = ssub.s32 %s12, %s19
      %p21 = scmp.eq.s32.totalorder %s20, 0
      %s23 = sadd.s32 %s22, 1
      %s24 = scalar_select %p21, %s22, %s23
      %p27 = pneg %p21
      %p28 = scmp.eq.s32.totalorder %s12, 1
      %p29 = por %p27, %p28
      %p30 = scmp.ne.s32.totalorder %s22, %s25
      %p31 = scmp.eq.s32.totalorder %s12, 0
      %p32 = por %p30, %p31
      %p33 = scmp.ne.s32.totalorder %s22, %s25
      %p34 = scmp.eq.s32.totalorder %s17, 1
      %p35 = por %p33, %p34
      %p36 = scmp.ne.s32.totalorder %s25, %s26
      %p37 = scmp.eq.s32.totalorder %s17, 0
      %p38 = por %p36, %p37
      %p39 = scmp.ne.s32.totalorder %s25, %s26
      %p40 = scmp.eq.s32.totalorder %s18, 1
      %p41 = por %p39, %p40
      %p43 = scmp.ne.s32.totalorder %s26, %s42
      %p44 = scmp.eq.s32.totalorder %s18, 0
      %p45 = por %p43, %p44
      %s47 = sadd.s32 %s46, 1
      %p50 = scmp.eq.s32.totalorder %s12, 1
      %p51 = scmp.ne.s32.totalorder %s46, %s48
      %p52 = scmp.eq.s32.totalorder %s12, 0
      %p53 = por %p51, %p52
      %p54 = scmp.ne.s32.totalorder %s46, %s48
      %p55 = scmp.eq.s32.totalorder %s17, 1
      %p56 = por %p54, %p55
      %p57 = scmp.ne.s32.totalorder %s48, %s49
      %p58 = scmp.eq.s32.totalorder %s17, 0
      %p59 = por %p57, %p58
      %p60 = scmp.ne.s32.totalorder %s48, %s49
      %p61 = scmp.eq.s32.totalorder %s18, 1
      %p62 = por %p60, %p61
      %p64 = scmp.ne.s32.totalorder %s49, %s63
      %p65 = scmp.eq.s32.totalorder %s18, 0
      %p66 = por %p64, %p65
      %s68 = sadd.s32 %s67, 1
      %p71 = scmp.eq.s32.totalorder %s12, 1
      %p72 = scmp.ne.s32.totalorder %s67, %s69
      %p73 = scmp.eq.s32.totalorder %s12, 0
      %p74 = por %p72, %p73
      %p75 = scmp.ne.s32.totalorder %s67, %s69
      %p76 = scmp.eq.s32.totalorder %s17, 1
      %p77 = por %p75, %p76
      %p78 = scmp.ne.s32.totalorder %s69, %s70
      %p79 = scmp.eq.s32.totalorder %s17, 0
      %p80 = por %p78, %p79
      %p81 = scmp.ne.s32.totalorder %s69, %s70
      %p82 = scmp.eq.s32.totalorder %s18, 1
      %p83 = por %p81, %p82
      %p85 = scmp.ne.s32.totalorder %s70, %s84
      %p86 = scmp.eq.s32.totalorder %s18, 0
      %p87 = por %p85, %p86
      %s88 = ssub.s32 %s12, %s19
      %p89 = scmp.eq.s32.totalorder %s88, 0
      %s91 = sadd.s32 %s90, 1
      %s92 = scalar_select %p89, %s90, %s91
      %p95 = pneg %p89
      %p96 = scmp.eq.s32.totalorder %s12, 1
      %p97 = por %p95, %p96
      %p98 = scmp.ne.s32.totalorder %s90, %s93
      %p99 = scmp.eq.s32.totalorder %s12, 0
      %p100 = por %p98, %p99
      %p101 = scmp.ne.s32.totalorder %s90, %s93
      %p102 = scmp.eq.s32.totalorder %s17, 1
      %p103 = por %p101, %p102
      %p104 = scmp.ne.s32.totalorder %s93, %s94
      %p105 = scmp.eq.s32.totalorder %s17, 0
      %p106 = por %p104, %p105
      %p107 = scmp.ne.s32.totalorder %s93, %s94
      %p108 = scmp.eq.s32.totalorder %s18, 1
      %p109 = por %p107, %p108
      %p111 = scmp.ne.s32.totalorder %s94, %s110
      %p112 = scmp.eq.s32.totalorder %s18, 0
      %p113 = por %p111, %p112
      %p114 = scmp.le.s32.totalorder 1, %s12
      %p115 = scmp.lt.s32.totalorder %s12, 3
      %p116 = pnand %p114, %p115
      %p117 = pneg %p116
      // Predicated region
      $region9: #{tpu_custom_call.1} parent=5 // pred_check
        _
      $region10: #{tpu_custom_call.1} parent=5 // pred_check_branch
        %119 = sbr.rel (%p116) target = $region12
      $region11: #{tpu_custom_call.1} parent=5 // pred_region
        %s120 = ssub.s32 %s12, 1
        // Predicated region
        $region13: #{tpu_custom_call.1} parent=11 // pred_check
          %p121 = pneg %p59
        $region14: #{tpu_custom_call.1} parent=11 // pred_check_branch
          %123 = sbr.rel (%p121) target = $region16
        $region15: #{tpu_custom_call.1} parent=11 // pred_region
          _
        $region16: #{tpu_custom_call.1} parent=11 // pred_fallthru
          _
        // Predicated region
        $region17: #{tpu_custom_call.1} parent=11 // pred_check
          %p124 = pneg %p80
        $region18: #{tpu_custom_call.1} parent=11 // pred_check_branch
          %126 = sbr.rel (%p124) target = $region20
        $region19: #{tpu_custom_call.1} parent=11 // pred_region
          _
        $region20: #{tpu_custom_call.1} parent=11 // pred_fallthru
          _
      $region12: #{tpu_custom_call.1} parent=5 // pred_fallthru
        _
      %p127 = scmp.lt.s32.totalorder %s12, 2
      // Predicated region
      $region21: #{tpu_custom_call.1} parent=5 // pred_check
        %p128 = pneg %p127
      $region22: #{tpu_custom_call.1} parent=5 // pred_check_branch
        %130 = sbr.rel (%p128) target = $region24
      $region23: #{tpu_custom_call.1} parent=5 // pred_region
        // Predicated region
        $region25: #{tpu_custom_call.1} parent=23 // pred_check
          %p131 = pneg %p32
        $region26: #{tpu_custom_call.1} parent=23 // pred_check_branch
          %133 = sbr.rel (%p131) target = $region28
        $region27: #{tpu_custom_call.1} parent=23 // pred_region
          %p134 = scmp.lt.s32.totalorder %s12, 1
          %s135 = scalar_select %p134, %s12, 1
          %s136 = smul.addr %s135, 40
          %s137 = smul.addr %s136, 4
          %s138 = scalar_lea.vmem %s0, %s137
        $region28: #{tpu_custom_call.1} parent=23 // pred_fallthru
          _
      $region24: #{tpu_custom_call.1} parent=5 // pred_fallthru
        _
      %p139 = scmp.le.s32.totalorder 1, %s12
      %p140 = scmp.lt.s32.totalorder %s12, 3
      %p141 = pnand %p139, %p140
      %p142 = pneg %p141
      // Predicated region
      $region29: #{tpu_custom_call.1} parent=5 // pred_check
        _
      $region30: #{tpu_custom_call.1} parent=5 // pred_check_branch
        %144 = sbr.rel (%p141) target = $region32
      $region31: #{tpu_custom_call.1} parent=5 // pred_region
        %s145 = ssub.s32 %s12, 1
        %p146 = scmp.lt.s32.totalorder %s17, 1
        %s147 = scalar_select %p146, %s17, 1
        %s148 = smul.addr %s147, 40
        %s149 = smul.addr %s148, 4
        %s150 = scalar_lea.vmem %s0, %s149
        %p151 = pneg %p38
        %p152 = pneg %p35
        %p153 = pneg %p59
        %p154 = pneg %p56
        %p155 = pneg %p80
        %p156 = pneg %p77
        %p157 = pneg %p106
        %p158 = pneg %p103
        %s159 = sand.u32 %s93, 1
        %s160 = scalar_lea.sflag [#allocation4], %s159
        %s161 = sand.u32 %s93, 1
        %s162 = smul.addr %s161, 64
        %s163 = scalar_lea.vmem [#allocation3], %s162
        %p164 = scmp.lt.s32.totalorder %s17, 1
        %s165 = scalar_select %p164, %s17, 1
        %s166 = smul.addr %s165, 40
        %s167 = smul.addr %s166, 4
        %s168 = scalar_lea.vmem %s0, %s167
        %v170 = vld [vmem:[%s168] sm:$0xf]
        %v171 = vld [vmem:[%s168 + $0x4] sm:$0xf]
        %v172 = vld [vmem:[%s168 + $0x8] sm:$0xf]
        %v173 = vld [vmem:[%s168 + $0xc] sm:$0xf]
        %v174 = vld [vmem:[%s168 + $0x10] sm:$0xf]
        %v175 = vld [vmem:[%s168 + $0x14] sm:$0xf]
        %v176 = vld [vmem:[%s168 + $0x18] sm:$0xf]
        %v177 = vld [vmem:[%s168 + $0x1c] sm:$0xf]
        %v178 = vld [vmem:[%s1] sm:$0xf]
        %v179 = vld [vmem:[%s1 + $0x4] sm:$0xf]
        %v180 = vld [vmem:[%s1 + $0x8] sm:$0xf]
        %v181 = vld [vmem:[%s1 + $0xc] sm:$0x3]
        %v190 = vunpack.c.l.b16 %v170
        %v191 = vunpack.c.l.b16 %v171
        %v192 = vunpack.c.l.b16 %v172
        %v193 = vunpack.c.l.b16 %v173
        %v194 = vunpack.c.l.b16 %v174
        %v195 = vunpack.c.l.b16 %v175
        %v196 = vunpack.c.l.b16 %v176
        %v197 = vunpack.c.l.b16 %v177
        %v198 = vpack.c.b16 %v191, %v190
        %v199 = vpack.c.b16 %v193, %v192
        %v200 = vpack.c.b16 %v195, %v194
        %v201 = vpack.c.b16 %v197, %v196
        %v206 = vunpack.c.l.b16 %v178
        %v207 = vunpack.c.l.b16 %v179
        %v208 = vunpack.c.l.b16 %v180
        %v209 = vunpack.c.l.b16 %v181
        %v210 = vpack.c.b16 %v207, %v206
        %v211 = vpack.c.b16 %v209, %v208
        %vm213 = vcmask 228352
        %v215 = vsel %vm213, %v198, 0
        %v218 = vsel %vm213, %v199, 0
        %v221 = vsel %vm213, %v200, 0
        %v224 = vsel %vm213, %v201, 0
        %vm226 = vcmask 1045504
        %v228 = vsel %vm226, %v211, 0
        %230 = vmatprep.subr.bf16.mxu0 0
        %231 = vmatpush1.bf16.msra.mxu0 %v210
        %232 = vmatprep.subr.bf16.mxu0 0
        %233 = vmatpush1.bf16.msra.mxu0 %v228
        %234 = vmatprep.subr.bf16.mxu0 0
        %235 = vmatpush1.bf16.msra.mxu0 0
        %236 = vmatprep.subr.bf16.mxu0 0
        %237 = vmatpush1.bf16.msra.mxu0 0
        %238 = vmatprep.subr.bf16.mxu0 0
        %239 = vmatpush1.bf16.msra.mxu0 0
        %240 = vmatprep.subr.bf16.mxu0 0
        %241 = vmatpush1.bf16.msra.mxu0 0
        %242 = vmatprep.subr.bf16.mxu0 0
        %243 = vmatpush1.bf16.msra.mxu0 0
        %244 = vmatprep.subr.bf16.mxu0 0
        %245 = vmatpush1.bf16.msra.mxu0 0
        %246 = vmatprep.subr.bf16.mxu0 0
        %247 = vmatpush1.bf16.msra.mxu0 0
        %248 = vmatprep.subr.bf16.mxu0 0
        %249 = vmatpush1.bf16.msra.mxu0 0
        %250 = vmatprep.subr.bf16.mxu0 0
        %251 = vmatpush1.bf16.msra.mxu0 0
        %252 = vmatprep.subr.bf16.mxu0 0
        %253 = vmatpush1.bf16.msra.mxu0 0
        %254 = vmatprep.subr.bf16.mxu0 0
        %255 = vmatpush1.bf16.msra.mxu0 0
        %256 = vmatprep.subr.bf16.mxu0 0
        %257 = vmatpush1.bf16.msra.mxu0 0
        %258 = vmatprep.subr.bf16.mxu0 0
        %259 = vmatpush1.bf16.msra.mxu0 0
        %260 = vmatprep.subr.bf16.mxu0 0
        %261 = vmatpush1.bf16.msra.mxu0 0
        %262 = vmatprep.mubr.bf16.mxu0 0
        %263 = vmatmul.mubr.bf16.gmra.mrb[0].mxu0 %v215
        %v264 = vpop.f32.mrb[0].mxu0
        %v265 = vadd.f32 0.0, %v264
        %v266 = vpop.f32.mrb[0].mxu0
        %v267 = vpop.f32.mrb[0].mxu0
        %v268 = vadd.f32 0.0, %v267
        %v269 = vpop.f32.mrb[0].mxu0
        %270 = vmatprep.mubr.bf16.mxu0 0
        %271 = vmatmul.mubr.bf16.gmra.mrb[0].mxu0 %v218
        %v272 = vpop.f32.mrb[0].mxu0
        %v273 = vadd.f32 0.0, %v272
        %v274 = vpop.f32.mrb[0].mxu0
        %v275 = vpop.f32.mrb[0].mxu0
        %v276 = vadd.f32 0.0, %v275
        %v277 = vpop.f32.mrb[0].mxu0
        %278 = vmatprep.mubr.bf16.mxu0 0
        %279 = vmatmul.mubr.bf16.gmra.mrb[0].mxu0 %v221
        %v280 = vpop.f32.mrb[0].mxu0
        %v281 = vadd.f32 0.0, %v280
        %v282 = vpop.f32.mrb[0].mxu0
        %v283 = vpop.f32.mrb[0].mxu0
        %v284 = vadd.f32 0.0, %v283
        %v285 = vpop.f32.mrb[0].mxu0
        %286 = vmatprep.mubr.bf16.mxu0 0
        %287 = vmatmul.mubr.bf16.gmra.mrb[0].mxu0 %v224
        %v288 = vpop.f32.mrb[0].mxu0
        %v289 = vadd.f32 0.0, %v288
        %v290 = vpop.f32.mrb[0].mxu0
        %v291 = vpop.f32.mrb[0].mxu0
        %v292 = vadd.f32 0.0, %v291
        %v293 = vpop.f32.mrb[0].mxu0
        %294 = vdwg.mxu0
        %295 = vst [vmem:[#allocation2] sm:$0xff] %v265
        %296 = vst [vmem:[#allocation2 + $0x8] sm:$0xff] %v268
        %297 = vst [vmem:[#allocation2 + $0x10] sm:$0xff] %v273
        %298 = vst [vmem:[#allocation2 + $0x18] sm:$0xff] %v276
        %299 = vst [vmem:[#allocation2 + $0x20] sm:$0xff] %v281
        %300 = vst [vmem:[#allocation2 + $0x28] sm:$0xff] %v284
        %301 = vst [vmem:[#allocation2 + $0x30] sm:$0xff] %v289
        %302 = vst [vmem:[#allocation2 + $0x38] sm:$0xff] %v292
        %s303 = scalar_lea.vmem %s168, 40
        %v304 = vld [vmem:[%s303] sm:$0xf]
        %v305 = vld [vmem:[%s303 + $0x4] sm:$0xf]
        %v306 = vld [vmem:[%s303 + $0x8] sm:$0xf]
        %v307 = vld [vmem:[%s303 + $0xc] sm:$0xf]
        %v308 = vld [vmem:[%s303 + $0x10] sm:$0xf]
        %v309 = vld [vmem:[%s303 + $0x14] sm:$0xf]
        %v310 = vld [vmem:[%s303 + $0x18] sm:$0xf]
        %v311 = vld [vmem:[%s303 + $0x1c] sm:$0xf]
        %s312 = scalar_lea.vmem %s1, 16
        %v313 = vld [vmem:[%s312] sm:$0xf]
        %v314 = vld [vmem:[%s312 + $0x4] sm:$0xf]
        %v315 = vld [vmem:[%s312 + $0x8] sm:$0xf]
        %v316 = vld [vmem:[%s312 + $0xc] sm:$0x3]
        %v325 = vunpack.c.l.b16 %v304
        %v326 = vunpack.c.l.b16 %v305
        %v327 = vunpack.c.l.b16 %v306
        %v328 = vunpack.c.l.b16 %v307
        %v329 = vunpack.c.l.b16 %v308
        %v330 = vunpack.c.l.b16 %v309
        %v331 = vunpack.c.l.b16 %v310
        %v332 = vunpack.c.l.b16 %v311
        %v333 = vpack.c.b16 %v326, %v325
        %v334 = vpack.c.b16 %v328, %v327
        %v335 = vpack.c.b16 %v330, %v329
        %v336 = vpack.c.b16 %v332, %v331
        %v341 = vunpack.c.l.b16 %v313
        %v342 = vunpack.c.l.b16 %v314
        %v343 = vunpack.c.l.b16 %v315
        %v344 = vunpack.c.l.b16 %v316
        %v345 = vpack.c.b16 %v342, %v341
        %v346 = vpack.c.b16 %v344, %v343
        %v349 = vsel %vm213, %v333, 0
        %v352 = vsel %vm213, %v334, 0
        %v355 = vsel %vm213, %v335, 0
        %v358 = vsel %vm213, %v336, 0
        %v361 = vsel %vm226, %v346, 0
        %363 = vmatprep.subr.bf16.mxu0 0
        %364 = vmatpush1.bf16.msra.mxu0 %v345
        %365 = vmatprep.subr.bf16.mxu0 0
        %366 = vmatpush1.bf16.msra.mxu0 %v361
        %367 = vmatprep.subr.bf16.mxu0 0
        %368 = vmatpush1.bf16.msra.mxu0 0
        %369 = vmatprep.subr.bf16.mxu0 0
        %370 = vmatpush1.bf16.msra.mxu0 0
        %371 = vmatprep.subr.bf16.mxu0 0
        %372 = vmatpush1.bf16.msra.mxu0 0
        %373 = vmatprep.subr.bf16.mxu0 0
        %374 = vmatpush1.bf16.msra.mxu0 0
        %375 = vmatprep.subr.bf16.mxu0 0
        %376 = vmatpush1.bf16.msra.mxu0 0
        %377 = vmatprep.subr.bf16.mxu0 0
        %378 = vmatpush1.bf16.msra.mxu0 0
        %379 = vmatprep.subr.bf16.mxu0 0
        %380 = vmatpush1.bf16.msra.mxu0 0
        %381 = vmatprep.subr.bf16.mxu0 0
        %382 = vmatpush1.bf16.msra.mxu0 0
        %383 = vmatprep.subr.bf16.mxu0 0
        %384 = vmatpush1.bf16.msra.mxu0 0
        %385 = vmatprep.subr.bf16.mxu0 0
        %386 = vmatpush1.bf16.msra.mxu0 0
        %387 = vmatprep.subr.bf16.mxu0 0
        %388 = vmatpush1.bf16.msra.mxu0 0
        %389 = vmatprep.subr.bf16.mxu0 0
        %390 = vmatpush1.bf16.msra.mxu0 0
        %391 = vmatprep.subr.bf16.mxu0 0
        %392 = vmatpush1.bf16.msra.mxu0 0
        %393 = vmatprep.subr.bf16.mxu0 0
        %394 = vmatpush1.bf16.msra.mxu0 0
        %395 = vmatprep.mubr.bf16.mxu0 0
        %396 = vmatmul.mubr.bf16.gmra.mrb[0].mxu0 %v349
        %v397 = vpop.f32.mrb[0].mxu0
        %v398 = vadd.f32 0.0, %v397
        %v399 = vpop.f32.mrb[0].mxu0
        %v400 = vpop.f32.mrb[0].mxu0
        %v401 = vadd.f32 0.0, %v400
        %v402 = vpop.f32.mrb[0].mxu0
        %403 = vmatprep.mubr.bf16.mxu0 0
        %404 = vmatmul.mubr.bf16.gmra.mrb[0].mxu0 %v352
        %v405 = vpop.f32.mrb[0].mxu0
        %v406 = vadd.f32 0.0, %v405
        %v407 = vpop.f32.mrb[0].mxu0
        %v408 = vpop.f32.mrb[0].mxu0
        %v409 = vadd.f32 0.0, %v408
        %v410 = vpop.f32.mrb[0].mxu0
        %411 = vmatprep.mubr.bf16.mxu0 0
        %412 = vmatmul.mubr.bf16.gmra.mrb[0].mxu0 %v355
        %v413 = vpop.f32.mrb[0].mxu0
        %v414 = vadd.f32 0.0, %v413
        %v415 = vpop.f32.mrb[0].mxu0
        %v416 = vpop.f32.mrb[0].mxu0
        %v417 = vadd.f32 0.0, %v416
        %v418 = vpop.f32.mrb[0].mxu0
        %419 = vmatprep.mubr.bf16.mxu0 0
        %420 = vmatmul.mubr.bf16.gmra.mrb[0].mxu0 %v358
        %v421 = vpop.f32.mrb[0].mxu0
        %v422 = vadd.f32 0.0, %v421
        %v423 = vpop.f32.mrb[0].mxu0
        %v424 = vpop.f32.mrb[0].mxu0
        %v425 = vadd.f32 0.0, %v424
        %v426 = vpop.f32.mrb[0].mxu0
        %427 = vdwg.mxu0
        %v428 = vld [vmem:[#allocation2] sm:$0xff]
        %v429 = vld [vmem:[#allocation2 + $0x8] sm:$0xff]
        %v430 = vld [vmem:[#allocation2 + $0x10] sm:$0xff]
        %v431 = vld [vmem:[#allocation2 + $0x18] sm:$0xff]
        %v432 = vld [vmem:[#allocation2 + $0x20] sm:$0xff]
        %v433 = vld [vmem:[#allocation2 + $0x28] sm:$0xff]
        %v434 = vld [vmem:[#allocation2 + $0x30] sm:$0xff]
        %v435 = vld [vmem:[#allocation2 + $0x38] sm:$0xff]
        %v436 = vadd.f32 %v428, %v398
        %v437 = vadd.f32 %v429, %v401
        %v438 = vadd.f32 %v430, %v406
        %v439 = vadd.f32 %v431, %v409
        %v440 = vadd.f32 %v432, %v414
        %v441 = vadd.f32 %v433, %v417
        %v442 = vadd.f32 %v434, %v422
        %v443 = vadd.f32 %v435, %v425
        %444 = vst [vmem:[#allocation2] sm:$0xff] %v436
        %445 = vst [vmem:[#allocation2 + $0x8] sm:$0xff] %v437
        %446 = vst [vmem:[#allocation2 + $0x10] sm:$0xff] %v438
        %447 = vst [vmem:[#allocation2 + $0x18] sm:$0xff] %v439
        %448 = vst [vmem:[#allocation2 + $0x20] sm:$0xff] %v440
        %449 = vst [vmem:[#allocation2 + $0x28] sm:$0xff] %v441
        %450 = vst [vmem:[#allocation2 + $0x30] sm:$0xff] %v442
        %451 = vst [vmem:[#allocation2 + $0x38] sm:$0xff] %v443
        %s452 = scalar_lea.vmem %s168, 80
        %v453 = vld [vmem:[%s452] sm:$0xf]
        %v454 = vld [vmem:[%s452 + $0x4] sm:$0xf]
        %v455 = vld [vmem:[%s452 + $0x8] sm:$0xf]
        %v456 = vld [vmem:[%s452 + $0xc] sm:$0xf]
        %v457 = vld [vmem:[%s452 + $0x10] sm:$0xf]
        %v458 = vld [vmem:[%s452 + $0x14] sm:$0xf]
        %v459 = vld [vmem:[%s452 + $0x18] sm:$0xf]
        %v460 = vld [vmem:[%s452 + $0x1c] sm:$0xf]
        %s461 = scalar_lea.vmem %s1, 32
        %v462 = vld [vmem:[%s461] sm:$0xf]
        %v463 = vld [vmem:[%s461 + $0x4] sm:$0xf]
        %v464 = vld [vmem:[%s461 + $0x8] sm:$0xf]
        %v465 = vld [vmem:[%s461 + $0xc] sm:$0x3]
        %v474 = vunpack.c.l.b16 %v453
        %v475 = vunpack.c.l.b16 %v454
        %v476 = vunpack.c.l.b16 %v455
        %v477 = vunpack.c.l.b16 %v456
        %v478 = vunpack.c.l.b16 %v457
        %v479 = vunpack.c.l.b16 %v458
        %v480 = vunpack.c.l.b16 %v459
        %v481 = vunpack.c.l.b16 %v460
        %v482 = vpack.c.b16 %v475, %v474
        %v483 = vpack.c.b16 %v477, %v476
        %v484 = vpack.c.b16 %v479, %v478
        %v485 = vpack.c.b16 %v481, %v480
        %v490 = vunpack.c.l.b16 %v462
        %v491 = vunpack.c.l.b16 %v463
        %v492 = vunpack.c.l.b16 %v464
        %v493 = vunpack.c.l.b16 %v465
        %v494 = vpack.c.b16 %v491, %v490
        %v495 = vpack.c.b16 %v493, %v492
        %v498 = vsel %vm213, %v482, 0
        %v501 = vsel %vm213, %v483, 0
        %v504 = vsel %vm213, %v484, 0
        %v507 = vsel %vm213, %v485, 0
        %v510 = vsel %vm226, %v495, 0
        %512 = vmatprep.subr.bf16.mxu0 0
        %513 = vmatpush1.bf16.msra.mxu0 %v494
        %514 = vmatprep.subr.bf16.mxu0 0
        %515 = vmatpush1.bf16.msra.mxu0 %v510
        %516 = vmatprep.subr.bf16.mxu0 0
        %517 = vmatpush1.bf16.msra.mxu0 0
        %518 = vmatprep.subr.bf16.mxu0 0
        %519 = vmatpush1.bf16.msra.mxu0 0
        %520 = vmatprep.subr.bf16.mxu0 0
        %521 = vmatpush1.bf16.msra.mxu0 0
        %522 = vmatprep.subr.bf16.mxu0 0
        %523 = vmatpush1.bf16.msra.mxu0 0
        %524 = vmatprep.subr.bf16.mxu0 0
        %525 = vmatpush1.bf16.msra.mxu0 0
        %526 = vmatprep.subr.bf16.mxu0 0
        %527 = vmatpush1.bf16.msra.mxu0 0
        %528 = vmatprep.subr.bf16.mxu0 0
        %529 = vmatpush1.bf16.msra.mxu0 0
        %530 = vmatprep.subr.bf16.mxu0 0
        %531 = vmatpush1.bf16.msra.mxu0 0
        %532 = vmatprep.subr.bf16.mxu0 0
        %533 = vmatpush1.bf16.msra.mxu0 0
        %534 = vmatprep.subr.bf16.mxu0 0
        %535 = vmatpush1.bf16.msra.mxu0 0
        %536 = vmatprep.subr.bf16.mxu0 0
        %537 = vmatpush1.bf16.msra.mxu0 0
        %538 = vmatprep.subr.bf16.mxu0 0
        %539 = vmatpush1.bf16.msra.mxu0 0
        %540 = vmatprep.subr.bf16.mxu0 0
        %541 = vmatpush1.bf16.msra.mxu0 0
        %542 = vmatprep.subr.bf16.mxu0 0
        %543 = vmatpush1.bf16.msra.mxu0 0
        %544 = vmatprep.mubr.bf16.mxu0 0
        %545 = vmatmul.mubr.bf16.gmra.mrb[0].mxu0 %v498
        %v546 = vpop.f32.mrb[0].mxu0
        %v547 = vadd.f32 0.0, %v546
        %v548 = vpop.f32.mrb[0].mxu0
        %v549 = vpop.f32.mrb[0].mxu0
        %v550 = vadd.f32 0.0, %v549
        %v551 = vpop.f32.mrb[0].mxu0
        %552 = vmatprep.mubr.bf16.mxu0 0
        %553 = vmatmul.mubr.bf16.gmra.mrb[0].mxu0 %v501
        %v554 = vpop.f32.mrb[0].mxu0
        %v555 = vadd.f32 0.0, %v554
        %v556 = vpop.f32.mrb[0].mxu0
        %v557 = vpop.f32.mrb[0].mxu0
        %v558 = vadd.f32 0.0, %v557
        %v559 = vpop.f32.mrb[0].mxu0
        %560 = vmatprep.mubr.bf16.mxu0 0
        %561 = vmatmul.mubr.bf16.gmra.mrb[0].mxu0 %v504
        %v562 = vpop.f32.mrb[0].mxu0
        %v563 = vadd.f32 0.0, %v562
        %v564 = vpop.f32.mrb[0].mxu0
        %v565 = vpop.f32.mrb[0].mxu0
        %v566 = vadd.f32 0.0, %v565
        %v567 = vpop.f32.mrb[0].mxu0
        %568 = vmatprep.mubr.bf16.mxu0 0
        %569 = vmatmul.mubr.bf16.gmra.mrb[0].mxu0 %v507
        %v570 = vpop.f32.mrb[0].mxu0
        %v571 = vadd.f32 0.0, %v570
        %v572 = vpop.f32.mrb[0].mxu0
        %v573 = vpop.f32.mrb[0].mxu0
        %v574 = vadd.f32 0.0, %v573
        %v575 = vpop.f32.mrb[0].mxu0
        %576 = vdwg.mxu0
        %v577 = vld [vmem:[#allocation2] sm:$0xff]
        %v578 = vld [vmem:[#allocation2 + $0x8] sm:$0xff]
        %v579 = vld [vmem:[#allocation2 + $0x10] sm:$0xff]
        %v580 = vld [vmem:[#allocation2 + $0x18] sm:$0xff]
        %v581 = vld [vmem:[#allocation2 + $0x20] sm:$0xff]
        %v582 = vld [vmem:[#allocation2 + $0x28] sm:$0xff]
        %v583 = vld [vmem:[#allocation2 + $0x30] sm:$0xff]
        %v584 = vld [vmem:[#allocation2 + $0x38] sm:$0xff]
        %v585 = vadd.f32 %v577, %v547
        %v586 = vadd.f32 %v578, %v550
        %v587 = vadd.f32 %v579, %v555
        %v588 = vadd.f32 %v580, %v558
        %v589 = vadd.f32 %v581, %v563
        %v590 = vadd.f32 %v582, %v566
        %v591 = vadd.f32 %v583, %v571
        %v592 = vadd.f32 %v584, %v574
        %593 = vst [vmem:[#allocation2] sm:$0xff] %v585
        %594 = vst [vmem:[#allocation2 + $0x8] sm:$0xff] %v586
        %595 = vst [vmem:[#allocation2 + $0x10] sm:$0xff] %v587
        %596 = vst [vmem:[#allocation2 + $0x18] sm:$0xff] %v588
        %597 = vst [vmem:[#allocation2 + $0x20] sm:$0xff] %v589
        %598 = vst [vmem:[#allocation2 + $0x28] sm:$0xff] %v590
        %599 = vst [vmem:[#allocation2 + $0x30] sm:$0xff] %v591
        %600 = vst [vmem:[#allocation2 + $0x38] sm:$0xff] %v592
        %s601 = scalar_lea.vmem %s168, 120
        %v602 = vld [vmem:[%s601] sm:$0xf]
        %v603 = vld [vmem:[%s601 + $0x4] sm:$0xf]
        %v604 = vld [vmem:[%s601 + $0x8] sm:$0xf]
        %v605 = vld [vmem:[%s601 + $0xc] sm:$0xf]
        %v606 = vld [vmem:[%s601 + $0x10] sm:$0xf]
        %v607 = vld [vmem:[%s601 + $0x14] sm:$0xf]
        %v608 = vld [vmem:[%s601 + $0x18] sm:$0xf]
        %v609 = vld [vmem:[%s601 + $0x1c] sm:$0xf]
        %s610 = scalar_lea.vmem %s1, 48
        %v611 = vld [vmem:[%s610] sm:$0xf]
        %v612 = vld [vmem:[%s610 + $0x4] sm:$0xf]
        %v613 = vld [vmem:[%s610 + $0x8] sm:$0xf]
        %v614 = vld [vmem:[%s610 + $0xc] sm:$0x3]
        %v623 = vunpack.c.l.b16 %v602
        %v624 = vunpack.c.l.b16 %v603
        %v625 = vunpack.c.l.b16 %v604
        %v626 = vunpack.c.l.b16 %v605
        %v627 = vunpack.c.l.b16 %v606
        %v628 = vunpack.c.l.b16 %v607
        %v629 = vunpack.c.l.b16 %v608
        %v630 = vunpack.c.l.b16 %v609
        %v631 = vpack.c.b16 %v624, %v623
        %v632 = vpack.c.b16 %v626, %v625
        %v633 = vpack.c.b16 %v628, %v627
        %v634 = vpack.c.b16 %v630, %v629
        %v639 = vunpack.c.l.b16 %v611
        %v640 = vunpack.c.l.b16 %v612
        %v641 = vunpack.c.l.b16 %v613
        %v642 = vunpack.c.l.b16 %v614
        %v643 = vpack.c.b16 %v640, %v639
        %v644 = vpack.c.b16 %v642, %v641
        %v647 = vsel %vm213, %v631, 0
        %v650 = vsel %vm213, %v632, 0
        %v653 = vsel %vm213, %v633, 0
        %v656 = vsel %vm213, %v634, 0
        %v659 = vsel %vm226, %v644, 0
        %661 = vmatprep.subr.bf16.mxu0 0
        %662 = vmatpush1.bf16.msra.mxu0 %v643
        %663 = vmatprep.subr.bf16.mxu0 0
        %664 = vmatpush1.bf16.msra.mxu0 %v659
        %665 = vmatprep.subr.bf16.mxu0 0
        %666 = vmatpush1.bf16.msra.mxu0 0
        %667 = vmatprep.subr.bf16.mxu0 0
        %668 = vmatpush1.bf16.msra.mxu0 0
        %669 = vmatprep.subr.bf16.mxu0 0
        %670 = vmatpush1.bf16.msra.mxu0 0
        %671 = vmatprep.subr.bf16.mxu0 0
        %672 = vmatpush1.bf16.msra.mxu0 0
        %673 = vmatprep.subr.bf16.mxu0 0
        %674 = vmatpush1.bf16.msra.mxu0 0
        %675 = vmatprep.subr.bf16.mxu0 0
        %676 = vmatpush1.bf16.msra.mxu0 0
        %677 = vmatprep.subr.bf16.mxu0 0
        %678 = vmatpush1.bf16.msra.mxu0 0
        %679 = vmatprep.subr.bf16.mxu0 0
        %680 = vmatpush1.bf16.msra.mxu0 0
        %681 = vmatprep.subr.bf16.mxu0 0
        %682 = vmatpush1.bf16.msra.mxu0 0
        %683 = vmatprep.subr.bf16.mxu0 0
        %684 = vmatpush1.bf16.msra.mxu0 0
        %685 = vmatprep.subr.bf16.mxu0 0
        %686 = vmatpush1.bf16.msra.mxu0 0
        %687 = vmatprep.subr.bf16.mxu0 0
        %688 = vmatpush1.bf16.msra.mxu0 0
        %689 = vmatprep.subr.bf16.mxu0 0
        %690 = vmatpush1.bf16.msra.mxu0 0
        %691 = vmatprep.subr.bf16.mxu0 0
        %692 = vmatpush1.bf16.msra.mxu0 0
        %693 = vmatprep.mubr.bf16.mxu0 0
        %694 = vmatmul.mubr.bf16.gmra.mrb[0].mxu0 %v647
        %v695 = vpop.f32.mrb[0].mxu0
        %v696 = vadd.f32 0.0, %v695
        %v697 = vpop.f32.mrb[0].mxu0
        %v698 = vpop.f32.mrb[0].mxu0
        %v699 = vadd.f32 0.0, %v698
        %v700 = vpop.f32.mrb[0].mxu0
        %701 = vmatprep.mubr.bf16.mxu0 0
        %702 = vmatmul.mubr.bf16.gmra.mrb[0].mxu0 %v650
        %v703 = vpop.f32.mrb[0].mxu0
        %v704 = vadd.f32 0.0, %v703
        %v705 = vpop.f32.mrb[0].mxu0
        %v706 = vpop.f32.mrb[0].mxu0
        %v707 = vadd.f32 0.0, %v706
        %v708 = vpop.f32.mrb[0].mxu0
        %709 = vmatprep.mubr.bf16.mxu0 0
        %710 = vmatmul.mubr.bf16.gmra.mrb[0].mxu0 %v653
        %v711 = vpop.f32.mrb[0].mxu0
        %v712 = vadd.f32 0.0, %v711
        %v713 = vpop.f32.mrb[0].mxu0
        %v714 = vpop.f32.mrb[0].mxu0
        %v715 = vadd.f32 0.0, %v714
        %v716 = vpop.f32.mrb[0].mxu0
        %717 = vmatprep.mubr.bf16.mxu0 0
        %718 = vmatmul.mubr.bf16.gmra.mrb[0].mxu0 %v656
        %v719 = vpop.f32.mrb[0].mxu0
        %v720 = vadd.f32 0.0, %v719
        %v721 = vpop.f32.mrb[0].mxu0
        %v722 = vpop.f32.mrb[0].mxu0
        %v723 = vadd.f32 0.0, %v722
        %v724 = vpop.f32.mrb[0].mxu0
        %725 = vdwg.mxu0
        %v726 = vld [vmem:[#allocation2] sm:$0xff]
        %v727 = vld [vmem:[#allocation2 + $0x8] sm:$0xff]
        %v728 = vld [vmem:[#allocation2 + $0x10] sm:$0xff]
        %v729 = vld [vmem:[#allocation2 + $0x18] sm:$0xff]
        %v730 = vld [vmem:[#allocation2 + $0x20] sm:$0xff]
        %v731 = vld [vmem:[#allocation2 + $0x28] sm:$0xff]
        %v732 = vld [vmem:[#allocation2 + $0x30] sm:$0xff]
        %v733 = vld [vmem:[#allocation2 + $0x38] sm:$0xff]
        %v734 = vadd.f32 %v726, %v696
        %v735 = vadd.f32 %v727, %v699
        %v736 = vadd.f32 %v728, %v704
        %v737 = vadd.f32 %v729, %v707
        %v738 = vadd.f32 %v730, %v712
        %v739 = vadd.f32 %v731, %v715
        %v740 = vadd.f32 %v732, %v720
        %v741 = vadd.f32 %v733, %v723
        %742 = vst [vmem:[#allocation2] sm:$0xff] %v734
        %743 = vst [vmem:[#allocation2 + $0x8] sm:$0xff] %v735
        %744 = vst [vmem:[#allocation2 + $0x10] sm:$0xff] %v736
        %745 = vst [vmem:[#allocation2 + $0x18] sm:$0xff] %v737
        %746 = vst [vmem:[#allocation2 + $0x20] sm:$0xff] %v738
        %747 = vst [vmem:[#allocation2 + $0x28] sm:$0xff] %v739
        %748 = vst [vmem:[#allocation2 + $0x30] sm:$0xff] %v740
        %749 = vst [vmem:[#allocation2 + $0x38] sm:$0xff] %v741
        %v750 = vld [vmem:[%s168 + $0x8] sm:$0xf]
        %v751 = vld [vmem:[%s168 + $0xc] sm:$0xf]
        %v752 = vld [vmem:[%s168 + $0x10] sm:$0xf]
        %v753 = vld [vmem:[%s168 + $0x14] sm:$0xf]
        %v754 = vld [vmem:[%s168 + $0x18] sm:$0xf]
        %v755 = vld [vmem:[%s168 + $0x1c] sm:$0xf]
        %v756 = vld [vmem:[%s168 + $0x20] sm:$0xf]
        %v757 = vld [vmem:[%s168 + $0x24] sm:$0xf]
        %s758 = scalar_lea.vmem %s1, 64
        %v759 = vld [vmem:[%s758] sm:$0xf]
        %v760 = vld [vmem:[%s758 + $0x4] sm:$0xf]
        %v761 = vld [vmem:[%s758 + $0x8] sm:$0xf]
        %v762 = vld [vmem:[%s758 + $0xc] sm:$0x3]
        %v771 = vunpack.c.l.b16 %v750
        %v772 = vunpack.c.l.b16 %v751
        %v773 = vunpack.c.l.b16 %v752
        %v774 = vunpack.c.l.b16 %v753
        %v775 = vunpack.c.l.b16 %v754
        %v776 = vunpack.c.l.b16 %v755
        %v777 = vunpack.c.l.b16 %v756
        %v778 = vunpack.c.l.b16 %v757
        %v779 = vpack.c.b16 %v772, %v771
        %v780 = vpack.c.b16 %v774, %v773
        %v781 = vpack.c.b16 %v776, %v775
        %v782 = vpack.c.b16 %v778, %v777
        %v787 = vunpack.c.l.b16 %v759
        %v788 = vunpack.c.l.b16 %v760
        %v789 = vunpack.c.l.b16 %v761
        %v790 = vunpack.c.l.b16 %v762
        %v791 = vpack.c.b16 %v788, %v787
        %v792 = vpack.c.b16 %v790, %v789
        %v795 = vsel %vm213, %v779, 0
        %v798 = vsel %vm213, %v780, 0
        %v801 = vsel %vm213, %v781, 0
        %v804 = vsel %vm213, %v782, 0
        %v807 = vsel %vm226, %v792, 0
        %809 = vmatprep.subr.bf16.mxu0 0
        %810 = vmatpush1.bf16.msra.mxu0 %v791
        %811 = vmatprep.subr.bf16.mxu0 0
        %812 = vmatpush1.bf16.msra.mxu0 %v807
        %813 = vmatprep.subr.bf16.mxu0 0
        %814 = vmatpush1.bf16.msra.mxu0 0
        %815 = vmatprep.subr.bf16.mxu0 0
        %816 = vmatpush1.bf16.msra.mxu0 0
        %817 = vmatprep.subr.bf16.mxu0 0
        %818 = vmatpush1.bf16.msra.mxu0 0
        %819 = vmatprep.subr.bf16.mxu0 0
        %820 = vmatpush1.bf16.msra.mxu0 0
        %821 = vmatprep.subr.bf16.mxu0 0
        %822 = vmatpush1.bf16.msra.mxu0 0
        %823 = vmatprep.subr.bf16.mxu0 0
        %824 = vmatpush1.bf16.msra.mxu0 0
        %825 = vmatprep.subr.bf16.mxu0 0
        %826 = vmatpush1.bf16.msra.mxu0 0
        %827 = vmatprep.subr.bf16.mxu0 0
        %828 = vmatpush1.bf16.msra.mxu0 0
        %829 = vmatprep.subr.bf16.mxu0 0
        %830 = vmatpush1.bf16.msra.mxu0 0
        %831 = vmatprep.subr.bf16.mxu0 0
        %832 = vmatpush1.bf16.msra.mxu0 0
        %833 = vmatprep.subr.bf16.mxu0 0
        %834 = vmatpush1.bf16.msra.mxu0 0
        %835 = vmatprep.subr.bf16.mxu0 0
        %836 = vmatpush1.bf16.msra.mxu0 0
        %837 = vmatprep.subr.bf16.mxu0 0
        %838 = vmatpush1.bf16.msra.mxu0 0
        %839 = vmatprep.subr.bf16.mxu0 0
        %840 = vmatpush1.bf16.msra.mxu0 0
        %841 = vmatprep.mubr.bf16.mxu0 0
        %842 = vmatmul.mubr.bf16.gmra.mrb[0].mxu0 %v795
        %v843 = vpop.f32.mrb[0].mxu0
        %v844 = vadd.f32 0.0, %v843
        %v845 = vpop.f32.mrb[0].mxu0
        %v846 = vpop.f32.mrb[0].mxu0
        %v847 = vadd.f32 0.0, %v846
        %v848 = vpop.f32.mrb[0].mxu0
        %849 = vmatprep.mubr.bf16.mxu0 0
        %850 = vmatmul.mubr.bf16.gmra.mrb[0].mxu0 %v798
        %v851 = vpop.f32.mrb[0].mxu0
        %v852 = vadd.f32 0.0, %v851
        %v853 = vpop.f32.mrb[0].mxu0
        %v854 = vpop.f32.mrb[0].mxu0
        %v855 = vadd.f32 0.0, %v854
        %v856 = vpop.f32.mrb[0].mxu0
        %857 = vmatprep.mubr.bf16.mxu0 0
        %858 = vmatmul.mubr.bf16.gmra.mrb[0].mxu0 %v801
        %v859 = vpop.f32.mrb[0].mxu0
        %v860 = vadd.f32 0.0, %v859
        %v861 = vpop.f32.mrb[0].mxu0
        %v862 = vpop.f32.mrb[0].mxu0
        %v863 = vadd.f32 0.0, %v862
        %v864 = vpop.f32.mrb[0].mxu0
        %865 = vmatprep.mubr.bf16.mxu0 0
        %866 = vmatmul.mubr.bf16.gmra.mrb[0].mxu0 %v804
        %v867 = vpop.f32.mrb[0].mxu0
        %v868 = vadd.f32 0.0, %v867
        %v869 = vpop.f32.mrb[0].mxu0
        %v870 = vpop.f32.mrb[0].mxu0
        %v871 = vadd.f32 0.0, %v870
        %v872 = vpop.f32.mrb[0].mxu0
        %873 = vdwg.mxu0
        %v874 = vld [vmem:[#allocation2] sm:$0xff]
        %v875 = vld [vmem:[#allocation2 + $0x8] sm:$0xff]
        %v876 = vld [vmem:[#allocation2 + $0x10] sm:$0xff]
        %v877 = vld [vmem:[#allocation2 + $0x18] sm:$0xff]
        %v878 = vld [vmem:[#allocation2 + $0x20] sm:$0xff]
        %v879 = vld [vmem:[#allocation2 + $0x28] sm:$0xff]
        %v880 = vld [vmem:[#allocation2 + $0x30] sm:$0xff]
        %v881 = vld [vmem:[#allocation2 + $0x38] sm:$0xff]
        %v882 = vadd.f32 %v874, %v844
        %v883 = vadd.f32 %v875, %v847
        %v884 = vadd.f32 %v876, %v852
        %v885 = vadd.f32 %v877, %v855
        %v886 = vadd.f32 %v878, %v860
        %v887 = vadd.f32 %v879, %v863
        %v888 = vadd.f32 %v880, %v868
        %v889 = vadd.f32 %v881, %v871
        %890 = vst [vmem:[#allocation2] sm:$0xff] %v882
        %891 = vst [vmem:[#allocation2 + $0x8] sm:$0xff] %v883
        %892 = vst [vmem:[#allocation2 + $0x10] sm:$0xff] %v884
        %893 = vst [vmem:[#allocation2 + $0x18] sm:$0xff] %v885
        %894 = vst [vmem:[#allocation2 + $0x20] sm:$0xff] %v886
        %895 = vst [vmem:[#allocation2 + $0x28] sm:$0xff] %v887
        %896 = vst [vmem:[#allocation2 + $0x30] sm:$0xff] %v888
        %897 = vst [vmem:[#allocation2 + $0x38] sm:$0xff] %v889
        %v898 = vld [vmem:[%s303 + $0x8] sm:$0xf]
        %v899 = vld [vmem:[%s303 + $0xc] sm:$0xf]
        %v900 = vld [vmem:[%s303 + $0x10] sm:$0xf]
        %v901 = vld [vmem:[%s303 + $0x14] sm:$0xf]
        %v902 = vld [vmem:[%s303 + $0x18] sm:$0xf]
        %v903 = vld [vmem:[%s303 + $0x1c] sm:$0xf]
        %v904 = vld [vmem:[%s303 + $0x20] sm:$0xf]
        %v905 = vld [vmem:[%s303 + $0x24] sm:$0xf]
        %s906 = scalar_lea.vmem %s1, 80
        %v907 = vld [vmem:[%s906] sm:$0xf]
        %v908 = vld [vmem:[%s906 + $0x4] sm:$0xf]
        %v909 = vld [vmem:[%s906 + $0x8] sm:$0xf]
        %v910 = vld [vmem:[%s906 + $0xc] sm:$0x3]
        %v919 = vunpack.c.l.b16 %v898
        %v920 = vunpack.c.l.b16 %v899
        %v921 = vunpack.c.l.b16 %v900
        %v922 = vunpack.c.l.b16 %v901
        %v923 = vunpack.c.l.b16 %v902
        %v924 = vunpack.c.l.b16 %v903
        %v925 = vunpack.c.l.b16 %v904
        %v926 = vunpack.c.l.b16 %v905
        %v927 = vpack.c.b16 %v920, %v919
        %v928 = vpack.c.b16 %v922, %v921
        %v929 = vpack.c.b16 %v924, %v923
        %v930 = vpack.c.b16 %v926, %v925
        %v935 = vunpack.c.l.b16 %v907
        %v936 = vunpack.c.l.b16 %v908
        %v937 = vunpack.c.l.b16 %v909
        %v938 = vunpack.c.l.b16 %v910
        %v939 = vpack.c.b16 %v936, %v935
        %v940 = vpack.c.b16 %v938, %v937
        %v943 = vsel %vm213, %v927, 0
        %v946 = vsel %vm213, %v928, 0
        %v949 = vsel %vm213, %v929, 0
        %v952 = vsel %vm213, %v930, 0
        %v955 = vsel %vm226, %v940, 0
        %957 = vmatprep.subr.bf16.mxu0 0
        %958 = vmatpush1.bf16.msra.mxu0 %v939
        %959 = vmatprep.subr.bf16.mxu0 0
        %960 = vmatpush1.bf16.msra.mxu0 %v955
        %961 = vmatprep.subr.bf16.mxu0 0
        %962 = vmatpush1.bf16.msra.mxu0 0
        %963 = vmatprep.subr.bf16.mxu0 0
        %964 = vmatpush1.bf16.msra.mxu0 0
        %965 = vmatprep.subr.bf16.mxu0 0
        %966 = vmatpush1.bf16.msra.mxu0 0
        %967 = vmatprep.subr.bf16.mxu0 0
        %968 = vmatpush1.bf16.msra.mxu0 0
        %969 = vmatprep.subr.bf16.mxu0 0
        %970 = vmatpush1.bf16.msra.mxu0 0
        %971 = vmatprep.subr.bf16.mxu0 0
        %972 = vmatpush1.bf16.msra.mxu0 0
        %973 = vmatprep.subr.bf16.mxu0 0
        %974 = vmatpush1.bf16.msra.mxu0 0
        %975 = vmatprep.subr.bf16.mxu0 0
        %976 = vmatpush1.bf16.msra.mxu0 0
        %977 = vmatprep.subr.bf16.mxu0 0
        %978 = vmatpush1.bf16.msra.mxu0 0
        %979 = vmatprep.subr.bf16.mxu0 0
        %980 = vmatpush1.bf16.msra.mxu0 0
        %981 = vmatprep.subr.bf16.mxu0 0
        %982 = vmatpush1.bf16.msra.mxu0 0
        %983 = vmatprep.subr.bf16.mxu0 0
        %984 = vmatpush1.bf16.msra.mxu0 0
        %985 = vmatprep.subr.bf16.mxu0 0
        %986 = vmatpush1.bf16.msra.mxu0 0
        %987 = vmatprep.subr.bf16.mxu0 0
        %988 = vmatpush1.bf16.msra.mxu0 0
        %989 = vmatprep.mubr.bf16.mxu0 0
        %990 = vmatmul.mubr.bf16.gmra.mrb[0].mxu0 %v943
        %v991 = vpop.f32.mrb[0].mxu0
        %v992 = vadd.f32 0.0, %v991
        %v993 = vpop.f32.mrb[0].mxu0
        %v994 = vpop.f32.mrb[0].mxu0
        %v995 = vadd.f32 0.0, %v994
        %v996 = vpop.f32.mrb[0].mxu0
        %997 = vmatprep.mubr.bf16.mxu0 0
        %998 = vmatmul.mubr.bf16.gmra.mrb[0].mxu0 %v946
        %v999 = vpop.f32.mrb[0].mxu0
        %v1000 = vadd.f32 0.0, %v999
        %v1001 = vpop.f32.mrb[0].mxu0
        %v1002 = vpop.f32.mrb[0].mxu0
        %v1003 = vadd.f32 0.0, %v1002
        %v1004 = vpop.f32.mrb[0].mxu0
        %1005 = vmatprep.mubr.bf16.mxu0 0
        %1006 = vmatmul.mubr.bf16.gmra.mrb[0].mxu0 %v949
        %v1007 = vpop.f32.mrb[0].mxu0
        %v1008 = vadd.f32 0.0, %v1007
        %v1009 = vpop.f32.mrb[0].mxu0
        %v1010 = vpop.f32.mrb[0].mxu0
        %v1011 = vadd.f32 0.0, %v1010
        %v1012 = vpop.f32.mrb[0].mxu0
        %1013 = vmatprep.mubr.bf16.mxu0 0
        %1014 = vmatmul.mubr.bf16.gmra.mrb[0].mxu0 %v952
        %v1015 = vpop.f32.mrb[0].mxu0
        %v1016 = vadd.f32 0.0, %v1015
        %v1017 = vpop.f32.mrb[0].mxu0
        %v1018 = vpop.f32.mrb[0].mxu0
        %v1019 = vadd.f32 0.0, %v1018
        %v1020 = vpop.f32.mrb[0].mxu0
        %1021 = vdwg.mxu0
        %v1022 = vld [vmem:[#allocation2] sm:$0xff]
        %v1023 = vld [vmem:[#allocation2 + $0x8] sm:$0xff]
        %v1024 = vld [vmem:[#allocation2 + $0x10] sm:$0xff]
        %v1025 = vld [vmem:[#allocation2 + $0x18] sm:$0xff]
        %v1026 = vld [vmem:[#allocation2 + $0x20] sm:$0xff]
        %v1027 = vld [vmem:[#allocation2 + $0x28] sm:$0xff]
        %v1028 = vld [vmem:[#allocation2 + $0x30] sm:$0xff]
        %v1029 = vld [vmem:[#allocation2 + $0x38] sm:$0xff]
        %v1030 = vadd.f32 %v1022, %v992
        %v1031 = vadd.f32 %v1023, %v995
        %v1032 = vadd.f32 %v1024, %v1000
        %v1033 = vadd.f32 %v1025, %v1003
        %v1034 = vadd.f32 %v1026, %v1008
        %v1035 = vadd.f32 %v1027, %v1011
        %v1036 = vadd.f32 %v1028, %v1016
        %v1037 = vadd.f32 %v1029, %v1019
        %1038 = vst [vmem:[#allocation2] sm:$0xff] %v1030
        %1039 = vst [vmem:[#allocation2 + $0x8] sm:$0xff] %v1031
        %1040 = vst [vmem:[#allocation2 + $0x10] sm:$0xff] %v1032
        %1041 = vst [vmem:[#allocation2 + $0x18] sm:$0xff] %v1033
        %1042 = vst [vmem:[#allocation2 + $0x20] sm:$0xff] %v1034
        %1043 = vst [vmem:[#allocation2 + $0x28] sm:$0xff] %v1035
        %1044 = vst [vmem:[#allocation2 + $0x30] sm:$0xff] %v1036
        %1045 = vst [vmem:[#allocation2 + $0x38] sm:$0xff] %v1037
        %v1046 = vld [vmem:[%s452 + $0x8] sm:$0xf]
        %v1047 = vld [vmem:[%s452 + $0xc] sm:$0xf]
        %v1048 = vld [vmem:[%s452 + $0x10] sm:$0xf]
        %v1049 = vld [vmem:[%s452 + $0x14] sm:$0xf]
        %v1050 = vld [vmem:[%s452 + $0x18] sm:$0xf]
        %v1051 = vld [vmem:[%s452 + $0x1c] sm:$0xf]
        %v1052 = vld [vmem:[%s452 + $0x20] sm:$0xf]
        %v1053 = vld [vmem:[%s452 + $0x24] sm:$0xf]
        %s1054 = scalar_lea.vmem %s1, 96
        %v1055 = vld [vmem:[%s1054] sm:$0xf]
        %v1056 = vld [vmem:[%s1054 + $0x4] sm:$0xf]
        %v1057 = vld [vmem:[%s1054 + $0x8] sm:$0xf]
        %v1058 = vld [vmem:[%s1054 + $0xc] sm:$0x3]
        %v1067 = vunpack.c.l.b16 %v1046
        %v1068 = vunpack.c.l.b16 %v1047
        %v1069 = vunpack.c.l.b16 %v1048
        %v1070 = vunpack.c.l.b16 %v1049
        %v1071 = vunpack.c.l.b16 %v1050
        %v1072 = vunpack.c.l.b16 %v1051
        %v1073 = vunpack.c.l.b16 %v1052
        %v1074 = vunpack.c.l.b16 %v1053
        %v1075 = vpack.c.b16 %v1068, %v1067
        %v1076 = vpack.c.b16 %v1070, %v1069
        %v1077 = vpack.c.b16 %v1072, %v1071
        %v1078 = vpack.c.b16 %v1074, %v1073
        %v1083 = vunpack.c.l.b16 %v1055
        %v1084 = vunpack.c.l.b16 %v1056
        %v1085 = vunpack.c.l.b16 %v1057
        %v1086 = vunpack.c.l.b16 %v1058
        %v1087 = vpack.c.b16 %v1084, %v1083
        %v1088 = vpack.c.b16 %v1086, %v1085
        %v1091 = vsel %vm213, %v1075, 0
        %v1094 = vsel %vm213, %v1076, 0
        %v1097 = vsel %vm213, %v1077, 0
        %v1100 = vsel %vm213, %v1078, 0
        %v1103 = vsel %vm226, %v1088, 0
        %1105 = vmatprep.subr.bf16.mxu0 0
        %1106 = vmatpush1.bf16.msra.mxu0 %v1087
        %1107 = vmatprep.subr.bf16.mxu0 0
        %1108 = vmatpush1.bf16.msra.mxu0 %v1103
        %1109 = vmatprep.subr.bf16.mxu0 0
        %1110 = vmatpush1.bf16.msra.mxu0 0
        %1111 = vmatprep.subr.bf16.mxu0 0
        %1112 = vmatpush1.bf16.msra.mxu0 0
        %1113 = vmatprep.subr.bf16.mxu0 0
        %1114 = vmatpush1.bf16.msra.mxu0 0
        %1115 = vmatprep.subr.bf16.mxu0 0
        %1116 = vmatpush1.bf16.msra.mxu0 0
        %1117 = vmatprep.subr.bf16.mxu0 0
        %1118 = vmatpush1.bf16.msra.mxu0 0
        %1119 = vmatprep.subr.bf16.mxu0 0
        %1120 = vmatpush1.bf16.msra.mxu0 0
        %1121 = vmatprep.subr.bf16.mxu0 0
        %1122 = vmatpush1.bf16.msra.mxu0 0
        %1123 = vmatprep.subr.bf16.mxu0 0
        %1124 = vmatpush1.bf16.msra.mxu0 0
        %1125 = vmatprep.subr.bf16.mxu0 0
        %1126 = vmatpush1.bf16.msra.mxu0 0
        %1127 = vmatprep.subr.bf16.mxu0 0
        %1128 = vmatpush1.bf16.msra.mxu0 0
        %1129 = vmatprep.subr.bf16.mxu0 0
        %1130 = vmatpush1.bf16.msra.mxu0 0
        %1131 = vmatprep.subr.bf16.mxu0 0
        %1132 = vmatpush1.bf16.msra.mxu0 0
        %1133 = vmatprep.subr.bf16.mxu0 0
        %1134 = vmatpush1.bf16.msra.mxu0 0
        %1135 = vmatprep.subr.bf16.mxu0 0
        %1136 = vmatpush1.bf16.msra.mxu0 0
        %1137 = vmatprep.mubr.bf16.mxu0 0
        %1138 = vmatmul.mubr.bf16.gmra.mrb[0].mxu0 %v1091
        %v1139 = vpop.f32.mrb[0].mxu0
        %v1140 = vadd.f32 0.0, %v1139
        %v1141 = vpop.f32.mrb[0].mxu0
        %v1142 = vpop.f32.mrb[0].mxu0
        %v1143 = vadd.f32 0.0, %v1142
        %v1144 = vpop.f32.mrb[0].mxu0
        %1145 = vmatprep.mubr.bf16.mxu0 0
        %1146 = vmatmul.mubr.bf16.gmra.mrb[0].mxu0 %v1094
        %v1147 = vpop.f32.mrb[0].mxu0
        %v1148 = vadd.f32 0.0, %v1147
        %v1149 = vpop.f32.mrb[0].mxu0
        %v1150 = vpop.f32.mrb[0].mxu0
        %v1151 = vadd.f32 0.0, %v1150
        %v1152 = vpop.f32.mrb[0].mxu0
        %1153 = vmatprep.mubr.bf16.mxu0 0
        %1154 = vmatmul.mubr.bf16.gmra.mrb[0].mxu0 %v1097
        %v1155 = vpop.f32.mrb[0].mxu0
        %v1156 = vadd.f32 0.0, %v1155
        %v1157 = vpop.f32.mrb[0].mxu0
        %v1158 = vpop.f32.mrb[0].mxu0
        %v1159 = vadd.f32 0.0, %v1158
        %v1160 = vpop.f32.mrb[0].mxu0
        %1161 = vmatprep.mubr.bf16.mxu0 0
        %1162 = vmatmul.mubr.bf16.gmra.mrb[0].mxu0 %v1100
        %v1163 = vpop.f32.mrb[0].mxu0
        %v1164 = vadd.f32 0.0, %v1163
        %v1165 = vpop.f32.mrb[0].mxu0
        %v1166 = vpop.f32.mrb[0].mxu0
        %v1167 = vadd.f32 0.0, %v1166
        %v1168 = vpop.f32.mrb[0].mxu0
        %1169 = vdwg.mxu0
        %v1170 = vld [vmem:[#allocation2] sm:$0xff]
        %v1171 = vld [vmem:[#allocation2 + $0x8] sm:$0xff]
        %v1172 = vld [vmem:[#allocation2 + $0x10] sm:$0xff]
        %v1173 = vld [vmem:[#allocation2 + $0x18] sm:$0xff]
        %v1174 = vld [vmem:[#allocation2 + $0x20] sm:$0xff]
        %v1175 = vld [vmem:[#allocation2 + $0x28] sm:$0xff]
        %v1176 = vld [vmem:[#allocation2 + $0x30] sm:$0xff]
        %v1177 = vld [vmem:[#allocation2 + $0x38] sm:$0xff]
        %v1178 = vadd.f32 %v1170, %v1140
        %v1179 = vadd.f32 %v1171, %v1143
        %v1180 = vadd.f32 %v1172, %v1148
        %v1181 = vadd.f32 %v1173, %v1151
        %v1182 = vadd.f32 %v1174, %v1156
        %v1183 = vadd.f32 %v1175, %v1159
        %v1184 = vadd.f32 %v1176, %v1164
        %v1185 = vadd.f32 %v1177, %v1167
        %1186 = vst [vmem:[#allocation2] sm:$0xff] %v1178
        %1187 = vst [vmem:[#allocation2 + $0x8] sm:$0xff] %v1179
        %1188 = vst [vmem:[#allocation2 + $0x10] sm:$0xff] %v1180
        %1189 = vst [vmem:[#allocation2 + $0x18] sm:$0xff] %v1181
        %1190 = vst [vmem:[#allocation2 + $0x20] sm:$0xff] %v1182
        %1191 = vst [vmem:[#allocation2 + $0x28] sm:$0xff] %v1183
        %1192 = vst [vmem:[#allocation2 + $0x30] sm:$0xff] %v1184
        %1193 = vst [vmem:[#allocation2 + $0x38] sm:$0xff] %v1185
        %v1194 = vld [vmem:[#allocation2] sm:$0xff]
        %v1195 = vld [vmem:[#allocation2 + $0x8] sm:$0xff]
        %v1196 = vld [vmem:[#allocation2 + $0x10] sm:$0xff]
        %v1197 = vld [vmem:[#allocation2 + $0x18] sm:$0xff]
        %v1198 = vld [vmem:[#allocation2 + $0x20] sm:$0xff]
        %v1199 = vld [vmem:[#allocation2 + $0x28] sm:$0xff]
        %v1200 = vld [vmem:[#allocation2 + $0x30] sm:$0xff]
        %v1201 = vld [vmem:[#allocation2 + $0x38] sm:$0xff]
        %v1202 = vld [vmem:[%s2] sm:$0x1]
        %v1204 = vlaneseq
        %v1205 = vshrl.u32 %v1204, 7
        %v1206 = vsub.s32 0, %v1205
        %v1207 = vrot.slane %v1202, %v1206
        %v1209 = vadd.f32 %v1194, %v1207
        %v1210 = vadd.f32 %v1195, %v1207
        %v1211 = vadd.f32 %v1196, %v1207
        %v1212 = vadd.f32 %v1197, %v1207
        %v1213 = vadd.f32 %v1198, %v1207
        %v1214 = vadd.f32 %v1199, %v1207
        %v1215 = vadd.f32 %v1200, %v1207
        %v1216 = vadd.f32 %v1201, %v1207
        %1217 = vst [vmem:[%s163] sm:$0xff] %v1209
        %1218 = vst [vmem:[%s163 + $0x8] sm:$0xff] %v1210
        %1219 = vst [vmem:[%s163 + $0x10] sm:$0xff] %v1211
        %1220 = vst [vmem:[%s163 + $0x18] sm:$0xff] %v1212
        %1221 = vst [vmem:[%s163 + $0x20] sm:$0xff] %v1213
        %1222 = vst [vmem:[%s163 + $0x28] sm:$0xff] %v1214
        %1223 = vst [vmem:[%s163 + $0x30] sm:$0xff] %v1215
        %1224 = vst [vmem:[%s163 + $0x38] sm:$0xff] %v1216
        %s1225 = sand.u32 %s93, 1
        %s1226 = scalar_lea.sflag [#allocation4], %s1225
        %s1227 = sand.u32 %s93, 1
        %s1228 = smul.addr %s1227, 64
        %s1229 = scalar_lea.vmem [#allocation3], %s1228
        // Predicated region
        $region33: #{tpu_custom_call.1} parent=31 // pred_check
          %p1230 = pneg %p103
        $region34: #{tpu_custom_call.1} parent=31 // pred_check_branch
          %1232 = sbr.rel (%p1230) target = $region36
        $region35: #{tpu_custom_call.1} parent=31 // pred_region
          %s1234 = ssub.s32 1024, 1024
          %1235 = vsyncadd %s1226, %s1234
          %s1236 = smul.addr %s17, 8
          %s1237 = smul.addr %s1236, 128
          %s1238 = scalar_lea.hbm %s3, %s1237
          %s1239 = sshll.u32 %s1229, 4
          %s1240 = int_to_ptr.vmem [resolvable:$true] %s1239
          %1245 = dma.vmem_to_hbm [thread:$0]  %s1240, 1024, %s1238, %s1226, 128, 128, 8
        $region36: #{tpu_custom_call.1} parent=31 // pred_fallthru
          _
      $region32: #{tpu_custom_call.1} parent=5 // pred_fallthru
        _
      %p1246 = scmp.le.s32.totalorder 2, %s12
      // Predicated region
      $region37: #{tpu_custom_call.1} parent=5 // pred_check
        %p1247 = pneg %p1246
      $region38: #{tpu_custom_call.1} parent=5 // pred_check_branch
        %1249 = sbr.rel (%p1247) target = $region40
      $region39: #{tpu_custom_call.1} parent=5 // pred_region
        %s1250 = ssub.s32 %s12, 2
        // Predicated region
        $region41: #{tpu_custom_call.1} parent=39 // pred_check
          %p1251 = pneg %p109
        $region42: #{tpu_custom_call.1} parent=39 // pred_check_branch
          %1253 = sbr.rel (%p1251) target = $region44
        $region43: #{tpu_custom_call.1} parent=39 // pred_region
          %s1254 = sand.u32 %s94, 1
          %s1255 = scalar_lea.sflag [#allocation4], %s1254
          %s1256 = sand.u32 %s94, 1
          %s1257 = smul.addr %s1256, 64
          %s1258 = scalar_lea.vmem [#allocation3], %s1257
          %1259 = dma.done %s1255, 1024
        $region44: #{tpu_custom_call.1} parent=39 // pred_fallthru
          _
      $region40: #{tpu_custom_call.1} parent=5 // pred_fallthru
        _
    $region6: #{tpu_custom_call.1} parent=1 // loop_footer
      %s16 = sadd.s32 1, %s12
    $region7: #{tpu_custom_call.1} parent=1 // loop_footer_branch
      %11 = sbr.rel target = $region3
    $region8: #{tpu_custom_call.1} parent=1 // loop_exit
      _
    %1260 = vsyncpa [#allocation4], 1
    %s1261 = scalar_lea.sflag [#allocation4], 1
    %1262 = vsyncpa %s1261, 1

</llo_original>
